<compile_context>
chip_gen: v6e
topology: v6e:2x2x1
jax: 0.10.0
libtpu: 0.0.40
codegen_flags: <defaults>
</compile_context>

<pallas_src>
import jax
import jax.numpy as jnp
from jax.experimental import pallas as pl
from jax.experimental.pallas import tpu as pltpu

SLICE_SIZES = (1, 10, 10, 10, 10, 1)   # ego_vel, obj_vel, rel_vel, class, distance, exec_time
HIDDEN_ATT = 32
INPUT_SIZE = 42
NUM_CLASSES = 5
OUT_PAD = 128                          # lane-dense padded output width


def _round_up(n, m):
    return (n + m - 1) // m * m


# ---------------------------------------------------------------------------
# Pallas kernel: one batch tile per grid step, weights resident in VMEM
# ---------------------------------------------------------------------------
def model_selector_kernel(
    x_ref,            # [TB, 42]
    w1_ref, b1_ref,   # [42, 192], [1, 192]   block-diag attention layer 1
    w2_ref, b2_ref,   # [192, 42], [1, 42]    block-diag attention layer 2
    wa_ref, ba_ref,   # [42, 64],  [1, 64]    Linear(42, 64)
    wb_ref, bb_ref,   # [64, 32],  [1, 32]    Linear(64, 32) with BN1 folded in
    wc_ref, bc_ref,   # [32, 128], [1, 128]   Linear(32, 5)  with BN2 folded in, lane-padded
    o_ref,            # [TB, 128]  (logits in lanes 0..4)
):
    x = x_ref[...]                                            # load once, reuse for the gate

    # --- fused AttentionBlocks: Linear -> ReLU -> Linear -> Sigmoid, then gate ---
    h = jnp.dot(x, w1_ref[...], preferred_element_type=jnp.float32) + b1_ref[...]
    h = jnp.maximum(h, 0.0)
    a = jnp.dot(h, w2_ref[...], preferred_element_type=jnp.float32) + b2_ref[...]
    a = jax.nn.sigmoid(a)
    xg = x * a                                                # [TB, 42]

    # --- MLP head (BN folded into wb/wc, Dropout = identity in eval) ---
    z = jnp.dot(xg, wa_ref[...], preferred_element_type=jnp.float32) + ba_ref[...]
    z = jnp.maximum(z, 0.0)
    z = jnp.dot(z, wb_ref[...], preferred_element_type=jnp.float32) + bb_ref[...]
    z = jnp.maximum(z, 0.0)
    o_ref[...] = jnp.dot(z, wc_ref[...], preferred_element_type=jnp.float32) + bc_ref[...]


# ---------------------------------------------------------------------------
# Parameter preparation: fold eval-mode BN into the following Linear, pad wc
# ---------------------------------------------------------------------------
def fold_params(p):
    s1, t1 = p["bn1_scale"], p["bn1_shift"]     # [1, 64]
    s2, t2 = p["bn2_scale"], p["bn2_shift"]     # [1, 32]
    wb, bb = p["wb"], p["bb"]                   # [64, 32], [1, 32]
    wc, bc = p["wc"], p["bc"]                   # [32, 5],  [1, 5]

    # (z*s + t) @ W + b  ==  z @ (diag(s) @ W) + (t @ W + b)
    wb_f = wb * s1.reshape(-1, 1)
    bb_f = t1 @ wb + bb
    wc_f = wc * s2.reshape(-1, 1)
    bc_f = t2 @ wc + bc

    # pad last layer to 128 output lanes -> unmasked lane-dense stores
    wc_pad = jnp.zeros((32, OUT_PAD), jnp.float32).at[:, :NUM_CLASSES].set(wc_f)
    bc_pad = jnp.zeros((1, OUT_PAD), jnp.float32).at[:, :NUM_CLASSES].set(bc_f)

    return dict(
        w1bd=p["w1bd"], b1all=p["b1all"], w2bd=p["w2bd"], b2all=p["b2all"],
        wa=p["wa"], ba=p["ba"], wb_f=wb_f, bb_f=bb_f, wc_f=wc_pad, bc_f=bc_pad,
    )


# ---------------------------------------------------------------------------
# Wrapper: batch-tiled grid, weights VMEM-resident, explicit VMEM budget
# ---------------------------------------------------------------------------
def model_selector_forward(x, params, *, tile_b=1024):
    """x: [B, 42] float32.  params: raw params from init_params()."""
    B = x.shape[0]
    kp = fold_params(params)

    tile_b = min(tile_b, max(8, _round_up(B, 8)))       # keep tile a multiple of 8
    B_pad = _round_up(B, tile_b)
    if B_pad != B:
        x = jnp.pad(x, ((0, B_pad - B), (0, 0)))
    grid = (B_pad // tile_b,)

    weights = (
        kp["w1bd"], kp["b1all"], kp["w2bd"], kp["b2all"],
        kp["wa"], kp["ba"], kp["wb_f"], kp["bb_f"], kp["wc_f"], kp["bc_f"],
    )

    in_specs = [pl.BlockSpec((tile_b, INPUT_SIZE), lambda i: (i, 0))]
    in_specs += [pl.BlockSpec(w.shape, lambda i: (0, 0)) for w in weights]  # resident
    out_spec = pl.BlockSpec((tile_b, OUT_PAD), lambda i: (i, 0))

    # VMEM budget: 2x double-buffered in/out tiles (input lane-padded to 128)
    # + live f32 intermediates (h:256 + z:128 + gate:128 lanes) + weights/headroom.
    vmem_bytes = 2 * tile_b * (128 + OUT_PAD) * 4 + tile_b * 512 * 4 + (2 << 20)
    vmem_bytes = int(min(max(vmem_bytes, 8 << 20), 48 << 20))   # fits v7x's 64 MiB

    flops = 2 * B_pad * (42 * 192 + 192 * 42 + 42 * 64 + 64 * 32 + 32 * OUT_PAD)
    cost = pl.CostEstimate(
        flops=flops,
        transcendentals=B_pad * INPUT_SIZE,                      # sigmoid
        bytes_accessed=B_pad * (INPUT_SIZE + OUT_PAD) * 4 + sum(w.size * 4 for w in weights),
    )

    out = pl.pallas_call(
        model_selector_kernel,
        out_shape=jax.ShapeDtypeStruct((B_pad, OUT_PAD), jnp.float32),
        grid=grid,
        in_specs=in_specs,
        out_specs=out_spec,
        compiler_params=pltpu.CompilerParams(
            dimension_semantics=("parallel",),
            vmem_limit_bytes=vmem_bytes,
        ),
        cost_estimate=cost,
    )(x, *weights)
    return out[:B, :NUM_CLASSES]


# ---------------------------------------------------------------------------
# Deterministic parameter init (mimics PyTorch nn.Linear / BatchNorm1d defaults)
# ---------------------------------------------------------------------------
def _linear_init(key, fan_in, fan_out):
    kw, kb = jax.random.split(key)
    bound = 1.0 / jnp.sqrt(jnp.float32(fan_in))
    w = jax.random.uniform(kw, (fan_in, fan_out), jnp.float32, -bound, bound)  # [in, out]
    b = jax.random.uniform(kb, (1, fan_out), jnp.float32, -bound, bound)
    return w, b


def init_params(key):
    keys = jax.random.split(key, 16)
    ki = iter(range(16))

    # --- attention blocks -> block-diagonal layout (exact: off-diag are zero) ---
    n_blocks = len(SLICE_SIZES)
    w1bd = jnp.zeros((INPUT_SIZE, n_blocks * HIDDEN_ATT), jnp.float32)
    b1all = jnp.zeros((1, n_blocks * HIDDEN_ATT), jnp.float32)
    w2bd = jnp.zeros((n_blocks * HIDDEN_ATT, INPUT_SIZE), jnp.float32)
    b2all = jnp.zeros((1, INPUT_SIZE), jnp.float32)

    f_off = 0
    for i, f in enumerate(SLICE_SIZES):
        w1, b1 = _linear_init(keys[next(ki)], f, HIDDEN_ATT)    # Linear(f, 32)
        w2, b2 = _linear_init(keys[next(ki)], HIDDEN_ATT, f)    # Linear(32, f)
        h_off = i * HIDDEN_ATT
        w1bd = w1bd.at[f_off:f_off + f, h_off:h_off + HIDDEN_ATT].set(w1)
        b1all = b1all.at[:, h_off:h_off + HIDDEN_ATT].set(b1)
        w2bd = w2bd.at[h_off:h_off + HIDDEN_ATT, f_off:f_off + f].set(w2)
        b2all = b2all.at[:, f_off:f_off + f].set(b2)
        f_off += f

    # --- MLP head ---
    wa, ba = _linear_init(keys[next(ki)], INPUT_SIZE, 64)
    wb, bb = _linear_init(keys[next(ki)], 64, 32)
    wc, bc = _linear_init(keys[next(ki)], 32, NUM_CLASSES)

    # BatchNorm1d eval-mode, PyTorch defaults: gamma=1, beta=0, mean=0, var=1
    eps = 1e-5
    def bn_fold(n):
        gamma = jnp.ones((1, n), jnp.float32)
        beta = jnp.zeros((1, n), jnp.float32)
        mean = jnp.zeros((1, n), jnp.float32)
        var = jnp.ones((1, n), jnp.float32)
        scale = gamma / jnp.sqrt(var + eps)
        shift = beta - mean * scale
        return scale, shift

    bn1_scale, bn1_shift = bn_fold(64)
    bn2_scale, bn2_shift = bn_fold(32)

    return dict(
        w1bd=w1bd, b1all=b1all, w2bd=w2bd, b2all=b2all,
        wa=wa, ba=ba, bn1_scale=bn1_scale, bn1_shift=bn1_shift,
        wb=wb, bb=bb, bn2_scale=bn2_scale, bn2_shift=bn2_shift,
        wc=wc, bc=bc,
    )


# ---------------------------------------------------------------------------
# Pure-JAX reference with explicit (unfolded) BatchNorm — validates the fold
# ---------------------------------------------------------------------------
def reference_forward(x, p):
    h = jnp.maximum(x @ p["w1bd"] + p["b1all"], 0.0)
    a = jax.nn.sigmoid(h @ p["w2bd"] + p["b2all"])
    xg = x * a
    z = jnp.maximum(xg @ p["wa"] + p["ba"], 0.0)
    z = z * p["bn1_scale"] + p["bn1_shift"]          # BatchNorm1d(64), eval
    z = jnp.maximum(z @ p["wb"] + p["bb"], 0.0)
    z = z * p["bn2_scale"] + p["bn2_shift"]          # BatchNorm1d(32), eval
    return z @ p["wc"] + p["bc"]


if __name__ == "__main__":
    key = jax.random.PRNGKey(0)
    k_x, k_x2, k_p = jax.random.split(key, 3)
    params = init_params(k_p)

    # Small single-tile case
    B = 8
    x = jax.random.normal(k_x, (B, INPUT_SIZE), jnp.float32)
    out = jax.block_until_ready(model_selector_forward(x, params))
    ref = reference_forward(x, params)
    assert out.shape == (B, NUM_CLASSES)
    assert jnp.allclose(out, ref, atol=2e-4, rtol=2e-4), "kernel mismatch vs reference (B=8)"

    # Multi-step grid case with batch padding (exercises tiling path)
    B2 = 300
    x2 = jax.random.normal(k_x2, (B2, INPUT_SIZE), jnp.float32)
    out2 = jax.block_until_ready(model_selector_forward(x2, params, tile_b=128))
    ref2 = reference_forward(x2, params)
    assert out2.shape == (B2, NUM_CLASSES)
    assert jnp.allclose(out2, ref2, atol=2e-4, rtol=2e-4), "kernel mismatch vs reference (B=300)"

    print("KERNEL_OK")
</pallas_src>

<mosaic_0001>
module attributes {stable_mosaic.version = 11 : i64} {
  func.func @model_selector_kernel(%arg0: i32, %arg1: memref<8x42xf32, #tpu.memory_space<vmem>>, %arg2: memref<42x192xf32, #tpu.memory_space<vmem>>, %arg3: memref<1x192xf32, #tpu.memory_space<vmem>>, %arg4: memref<192x42xf32, #tpu.memory_space<vmem>>, %arg5: memref<1x42xf32, #tpu.memory_space<vmem>>, %arg6: memref<42x64xf32, #tpu.memory_space<vmem>>, %arg7: memref<1x64xf32, #tpu.memory_space<vmem>>, %arg8: memref<64x32xf32, #tpu.memory_space<vmem>>, %arg9: memref<1x32xf32, #tpu.memory_space<vmem>>, %arg10: memref<32x128xf32, #tpu.memory_space<vmem>>, %arg11: memref<1x128xf32, #tpu.memory_space<vmem>>, %arg12: memref<8x128xf32, #tpu.memory_space<vmem>>) attributes {dimension_semantics = [#tpu.dimension_semantics<parallel>], iteration_bounds = array<i64: 1>, scalar_prefetch = 0 : i64, scratch_operands = 0 : i64, tpu.core_type = #tpu.core_type<tc>, window_params = [{transform_indices = @transform_0, window_bounds = array<i64: 8, 42>}, {pipeline_mode = #tpu.pipeline_mode<synchronous>, transform_indices = @transform_1, window_bounds = array<i64: 42, 192>}, {pipeline_mode = #tpu.pipeline_mode<synchronous>, transform_indices = @transform_2, window_bounds = array<i64: 1, 192>}, {pipeline_mode = #tpu.pipeline_mode<synchronous>, transform_indices = @transform_3, window_bounds = array<i64: 192, 42>}, {pipeline_mode = #tpu.pipeline_mode<synchronous>, transform_indices = @transform_4, window_bounds = array<i64: 1, 42>}, {pipeline_mode = #tpu.pipeline_mode<synchronous>, transform_indices = @transform_5, window_bounds = array<i64: 42, 64>}, {pipeline_mode = #tpu.pipeline_mode<synchronous>, transform_indices = @transform_6, window_bounds = array<i64: 1, 64>}, {pipeline_mode = #tpu.pipeline_mode<synchronous>, transform_indices = @transform_7, window_bounds = array<i64: 64, 32>}, {pipeline_mode = #tpu.pipeline_mode<synchronous>, transform_indices = @transform_8, window_bounds = array<i64: 1, 32>}, {pipeline_mode = #tpu.pipeline_mode<synchronous>, transform_indices = @transform_9, window_bounds = array<i64: 32, 128>}, {pipeline_mode = #tpu.pipeline_mode<synchronous>, transform_indices = @transform_10, window_bounds = array<i64: 1, 128>}, {transform_indices = @transform_11, window_bounds = array<i64: 8, 128>}]} {
    %c0 = arith.constant 0 : index
    %c0_0 = arith.constant 0 : index
    %0 = vector.load %arg1[%c0, %c0_0] : memref<8x42xf32, #tpu.memory_space<vmem>>, vector<8x42xf32>
    %c0_1 = arith.constant 0 : index
    %c0_2 = arith.constant 0 : index
    %1 = vector.load %arg2[%c0_1, %c0_2] : memref<42x192xf32, #tpu.memory_space<vmem>>, vector<42x192xf32>
    %cst = arith.constant dense<0.000000e+00> : vector<8x192xf32>
    %2 = tpu.matmul %0, %1, %cst {dimension_numbers = #tpu.dot_dimension_numbers<[1], [0], [0], [1], [0, 0, 1, 1], [], []>} : vector<8x42xf32>, vector<42x192xf32>, vector<8x192xf32> -> vector<8x192xf32>
    %c0_3 = arith.constant 0 : index
    %c0_4 = arith.constant 0 : index
    %3 = vector.load %arg3[%c0_3, %c0_4] : memref<1x192xf32, #tpu.memory_space<vmem>>, vector<1x192xf32>
    %4 = vector.broadcast %3 : vector<1x192xf32> to vector<8x192xf32>
    %5 = arith.addf %2, %4 : vector<8x192xf32>
    %cst_5 = arith.constant 0.000000e+00 : f32
    %6 = vector.broadcast %cst_5 : f32 to vector<8x192xf32>
    %7 = arith.maximumf %5, %6 : vector<8x192xf32>
    %c0_6 = arith.constant 0 : index
    %c0_7 = arith.constant 0 : index
    %8 = vector.load %arg4[%c0_6, %c0_7] : memref<192x42xf32, #tpu.memory_space<vmem>>, vector<192x42xf32>
    %cst_8 = arith.constant dense<0.000000e+00> : vector<8x42xf32>
    %9 = tpu.matmul %7, %8, %cst_8 {dimension_numbers = #tpu.dot_dimension_numbers<[1], [0], [0], [1], [0, 0, 1, 1], [], []>} : vector<8x192xf32>, vector<192x42xf32>, vector<8x42xf32> -> vector<8x42xf32>
    %c0_9 = arith.constant 0 : index
    %c0_10 = arith.constant 0 : index
    %10 = vector.load %arg5[%c0_9, %c0_10] : memref<1x42xf32, #tpu.memory_space<vmem>>, vector<1x42xf32>
    %11 = vector.broadcast %10 : vector<1x42xf32> to vector<8x42xf32>
    %12 = arith.addf %9, %11 : vector<8x42xf32>
    %13 = arith.negf %12 : vector<8x42xf32>
    %14 = math.exp %13 : vector<8x42xf32>
    %cst_11 = arith.constant 1.000000e+00 : f32
    %15 = vector.broadcast %cst_11 : f32 to vector<8x42xf32>
    %16 = arith.addf %15, %14 : vector<8x42xf32>
    %17 = arith.divf %15, %16 : vector<8x42xf32>
    %18 = arith.mulf %0, %17 : vector<8x42xf32>
    %c0_12 = arith.constant 0 : index
    %c0_13 = arith.constant 0 : index
    %19 = vector.load %arg6[%c0_12, %c0_13] : memref<42x64xf32, #tpu.memory_space<vmem>>, vector<42x64xf32>
    %cst_14 = arith.constant dense<0.000000e+00> : vector<8x64xf32>
    %20 = tpu.matmul %18, %19, %cst_14 {dimension_numbers = #tpu.dot_dimension_numbers<[1], [0], [0], [1], [0, 0, 1, 1], [], []>} : vector<8x42xf32>, vector<42x64xf32>, vector<8x64xf32> -> vector<8x64xf32>
    %c0_15 = arith.constant 0 : index
    %c0_16 = arith.constant 0 : index
    %21 = vector.load %arg7[%c0_15, %c0_16] : memref<1x64xf32, #tpu.memory_space<vmem>>, vector<1x64xf32>
    %22 = vector.broadcast %21 : vector<1x64xf32> to vector<8x64xf32>
    %23 = arith.addf %20, %22 : vector<8x64xf32>
    %cst_17 = arith.constant 0.000000e+00 : f32
    %24 = vector.broadcast %cst_17 : f32 to vector<8x64xf32>
    %25 = arith.maximumf %23, %24 : vector<8x64xf32>
    %c0_18 = arith.constant 0 : index
    %c0_19 = arith.constant 0 : index
    %26 = vector.load %arg8[%c0_18, %c0_19] : memref<64x32xf32, #tpu.memory_space<vmem>>, vector<64x32xf32>
    %cst_20 = arith.constant dense<0.000000e+00> : vector<8x32xf32>
    %27 = tpu.matmul %25, %26, %cst_20 {dimension_numbers = #tpu.dot_dimension_numbers<[1], [0], [0], [1], [0, 0, 1, 1], [], []>} : vector<8x64xf32>, vector<64x32xf32>, vector<8x32xf32> -> vector<8x32xf32>
    %c0_21 = arith.constant 0 : index
    %c0_22 = arith.constant 0 : index
    %28 = vector.load %arg9[%c0_21, %c0_22] : memref<1x32xf32, #tpu.memory_space<vmem>>, vector<1x32xf32>
    %29 = vector.broadcast %28 : vector<1x32xf32> to vector<8x32xf32>
    %30 = arith.addf %27, %29 : vector<8x32xf32>
    %cst_23 = arith.constant 0.000000e+00 : f32
    %31 = vector.broadcast %cst_23 : f32 to vector<8x32xf32>
    %32 = arith.maximumf %30, %31 : vector<8x32xf32>
    %c0_24 = arith.constant 0 : index
    %c0_25 = arith.constant 0 : index
    %33 = vector.load %arg10[%c0_24, %c0_25] : memref<32x128xf32, #tpu.memory_space<vmem>>, vector<32x128xf32>
    %cst_26 = arith.constant dense<0.000000e+00> : vector<8x128xf32>
    %34 = tpu.matmul %32, %33, %cst_26 {dimension_numbers = #tpu.dot_dimension_numbers<[1], [0], [0], [1], [0, 0, 1, 1], [], []>} : vector<8x32xf32>, vector<32x128xf32>, vector<8x128xf32> -> vector<8x128xf32>
    %c0_27 = arith.constant 0 : index
    %c0_28 = arith.constant 0 : index
    %35 = vector.load %arg11[%c0_27, %c0_28] : memref<1x128xf32, #tpu.memory_space<vmem>>, vector<1x128xf32>
    %36 = vector.broadcast %35 : vector<1x128xf32> to vector<8x128xf32>
    %37 = arith.addf %34, %36 : vector<8x128xf32>
    %c0_29 = arith.constant 0 : index
    %c0_30 = arith.constant 0 : index
    %38 = vector.load %arg12[%c0_29, %c0_30] : memref<8x128xf32, #tpu.memory_space<vmem>>, vector<8x128xf32>
    tpu.vector_store %arg12[%c0_29, %c0_30], %37 {strides = array<i32>} : memref<8x128xf32, #tpu.memory_space<vmem>>, vector<8x128xf32>,
    return
  }
  func.func @transform_0(%arg0: i32) -> (i32, i32) {
    %c0_i32 = arith.constant 0 : i32
    %c0_i32_0 = arith.constant 0 : i32
    return %arg0, %c0_i32 : i32, i32
  }
  func.func @transform_1(%arg0: i32) -> (i32, i32) {
    %c0_i32 = arith.constant 0 : i32
    %c0_i32_0 = arith.constant 0 : i32
    %c0_i32_1 = arith.constant 0 : i32
    return %c0_i32, %c0_i32_0 : i32, i32
  }
  func.func @transform_2(%arg0: i32) -> (i32, i32) {
    %c0_i32 = arith.constant 0 : i32
    %c0_i32_0 = arith.constant 0 : i32
    %c0_i32_1 = arith.constant 0 : i32
    return %c0_i32, %c0_i32_0 : i32, i32
  }
  func.func @transform_3(%arg0: i32) -> (i32, i32) {
    %c0_i32 = arith.constant 0 : i32
    %c0_i32_0 = arith.constant 0 : i32
    %c0_i32_1 = arith.constant 0 : i32
    return %c0_i32, %c0_i32_0 : i32, i32
  }
  func.func @transform_4(%arg0: i32) -> (i32, i32) {
    %c0_i32 = arith.constant 0 : i32
    %c0_i32_0 = arith.constant 0 : i32
    %c0_i32_1 = arith.constant 0 : i32
    return %c0_i32, %c0_i32_0 : i32, i32
  }
  func.func @transform_5(%arg0: i32) -> (i32, i32) {
    %c0_i32 = arith.constant 0 : i32
    %c0_i32_0 = arith.constant 0 : i32
    %c0_i32_1 = arith.constant 0 : i32
    return %c0_i32, %c0_i32_0 : i32, i32
  }
  func.func @transform_6(%arg0: i32) -> (i32, i32) {
    %c0_i32 = arith.constant 0 : i32
    %c0_i32_0 = arith.constant 0 : i32
    %c0_i32_1 = arith.constant 0 : i32
    return %c0_i32, %c0_i32_0 : i32, i32
  }
  func.func @transform_7(%arg0: i32) -> (i32, i32) {
    %c0_i32 = arith.constant 0 : i32
    %c0_i32_0 = arith.constant 0 : i32
    %c0_i32_1 = arith.constant 0 : i32
    return %c0_i32, %c0_i32_0 : i32, i32
  }
  func.func @transform_8(%arg0: i32) -> (i32, i32) {
    %c0_i32 = arith.constant 0 : i32
    %c0_i32_0 = arith.constant 0 : i32
    %c0_i32_1 = arith.constant 0 : i32
    return %c0_i32, %c0_i32_0 : i32, i32
  }
  func.func @transform_9(%arg0: i32) -> (i32, i32) {
    %c0_i32 = arith.constant 0 : i32
    %c0_i32_0 = arith.constant 0 : i32
    %c0_i32_1 = arith.constant 0 : i32
    return %c0_i32, %c0_i32_0 : i32, i32
  }
  func.func @transform_10(%arg0: i32) -> (i32, i32) {
    %c0_i32 = arith.constant 0 : i32
    %c0_i32_0 = arith.constant 0 : i32
    %c0_i32_1 = arith.constant 0 : i32
    return %c0_i32, %c0_i32_0 : i32, i32
  }
  func.func @transform_11(%arg0: i32) -> (i32, i32) {
    %c0_i32 = arith.constant 0 : i32
    %c0_i32_0 = arith.constant 0 : i32
    return %arg0, %c0_i32 : i32, i32
  }
}

</mosaic_0001>

<llo_original>
// kernel: tpu_custom_call.1
$region0: #{tpu_custom_call.1}
  #allocation0 [shape = 'u32[]', space=smem, size = 0x4, offset = 0x4, fixed_abs, tag = 'smem constant byte address 0x4 - core index']
  #allocation1 [shape = 'u32[144,128]{1,0:T(1,128)}', space=vmem, size = 0x12000, scoped, tag = 'internal scratch']
  %s0 = inlined_call_operand.vmem [shape: f32[8,42], index: 0, kind: input, shape index: {}]
  %s1 = inlined_call_operand.vmem [shape: f32[42,192], index: 1, kind: input, shape index: {}]
  %s2 = inlined_call_operand.vmem [shape: f32[1,192], index: 2, kind: input, shape index: {}]
  %s3 = inlined_call_operand.vmem [shape: f32[192,42], index: 3, kind: input, shape index: {}]
  %s4 = inlined_call_operand.vmem [shape: f32[1,42], index: 4, kind: input, shape index: {}]
  %s5 = inlined_call_operand.vmem [shape: f32[42,64], index: 5, kind: input, shape index: {}]
  %s6 = inlined_call_operand.vmem [shape: f32[1,64], index: 6, kind: input, shape index: {}]
  %s7 = inlined_call_operand.vmem [shape: f32[64,32], index: 7, kind: input, shape index: {}]
  %s8 = inlined_call_operand.vmem [shape: f32[1,32], index: 8, kind: input, shape index: {}]
  %s9 = inlined_call_operand.vmem [shape: f32[32,128], index: 9, kind: input, shape index: {}]
  %s10 = inlined_call_operand.vmem [shape: f32[1,128], index: 10, kind: input, shape index: {}]
  %s11 = inlined_call_operand.hbm [shape: f32[8,128], index: 11, kind: output, shape index: {}]
  %s12 = sld [smem:[#allocation0]]
  $region54: #{tpu_custom_call.1} parent=0
    _
  %s14 = ssub.s32 1, %s12
  %s15 = scalar_select 0, %s14, %s12
  $region1: #{tpu_custom_call.1} parent=0
    #allocation2 [shape = 'u8[4096]{0}', space=vmem, size = 0x1000, scoped, tag = 'output window, operand 0, single buffered']
    #allocation3 [shape = 's32[1]{0}', space=sflag, size = 0x4, scoped, tag = 'scoped memory for tpu_custom_call.1']
    %16 = vsyncpa [#allocation3], 0
    // Predicated region
    $region2: #{tpu_custom_call.1} parent=1 // pred_check
      _
    $region3: #{tpu_custom_call.1} parent=1 // pred_check_branch
      %18 = sbr.rel (0) target = $region5
    $region4: #{tpu_custom_call.1} parent=1 // pred_region
      _
    $region5: #{tpu_custom_call.1} parent=1 // pred_fallthru
      _
    // Predicated region
    $region6: #{tpu_custom_call.1} parent=1 // pred_check
      _
    $region7: #{tpu_custom_call.1} parent=1 // pred_check_branch
      %20 = sbr.rel (0) target = $region9
    $region8: #{tpu_custom_call.1} parent=1 // pred_region
      _
    $region9: #{tpu_custom_call.1} parent=1 // pred_fallthru
      _
    // Predicated region
    $region10: #{tpu_custom_call.1} parent=1 // pred_check
      _
    $region11: #{tpu_custom_call.1} parent=1 // pred_check_branch
      %22 = sbr.rel (0) target = $region13
    $region12: #{tpu_custom_call.1} parent=1 // pred_region
      _
    $region13: #{tpu_custom_call.1} parent=1 // pred_fallthru
      _
    // Predicated region
    $region14: #{tpu_custom_call.1} parent=1 // pred_check
      _
    $region15: #{tpu_custom_call.1} parent=1 // pred_check_branch
      %24 = sbr.rel (0) target = $region17
    $region16: #{tpu_custom_call.1} parent=1 // pred_region
      _
    $region17: #{tpu_custom_call.1} parent=1 // pred_fallthru
      _
    // Predicated region
    $region18: #{tpu_custom_call.1} parent=1 // pred_check
      _
    $region19: #{tpu_custom_call.1} parent=1 // pred_check_branch
      %26 = sbr.rel (0) target = $region21
    $region20: #{tpu_custom_call.1} parent=1 // pred_region
      _
    $region21: #{tpu_custom_call.1} parent=1 // pred_fallthru
      _
    // Predicated region
    $region22: #{tpu_custom_call.1} parent=1 // pred_check
      _
    $region23: #{tpu_custom_call.1} parent=1 // pred_check_branch
      %28 = sbr.rel (0) target = $region25
    $region24: #{tpu_custom_call.1} parent=1 // pred_region
      _
    $region25: #{tpu_custom_call.1} parent=1 // pred_fallthru
      _
    // Predicated region
    $region26: #{tpu_custom_call.1} parent=1 // pred_check
      _
    $region27: #{tpu_custom_call.1} parent=1 // pred_check_branch
      %30 = sbr.rel (0) target = $region29
    $region28: #{tpu_custom_call.1} parent=1 // pred_region
      _
    $region29: #{tpu_custom_call.1} parent=1 // pred_fallthru
      _
    // Predicated region
    $region30: #{tpu_custom_call.1} parent=1 // pred_check
      _
    $region31: #{tpu_custom_call.1} parent=1 // pred_check_branch
      %32 = sbr.rel (0) target = $region33
    $region32: #{tpu_custom_call.1} parent=1 // pred_region
      _
    $region33: #{tpu_custom_call.1} parent=1 // pred_fallthru
      _
    // Predicated region
    $region34: #{tpu_custom_call.1} parent=1 // pred_check
      _
    $region35: #{tpu_custom_call.1} parent=1 // pred_check_branch
      %34 = sbr.rel (0) target = $region37
    $region36: #{tpu_custom_call.1} parent=1 // pred_region
      _
    $region37: #{tpu_custom_call.1} parent=1 // pred_fallthru
      _
    // Predicated region
    $region38: #{tpu_custom_call.1} parent=1 // pred_check
      _
    $region39: #{tpu_custom_call.1} parent=1 // pred_check_branch
      %36 = sbr.rel (0) target = $region41
    $region40: #{tpu_custom_call.1} parent=1 // pred_region
      _
    $region41: #{tpu_custom_call.1} parent=1 // pred_fallthru
      _
    // Predicated region
    $region42: #{tpu_custom_call.1} parent=1 // pred_check
      _
    $region43: #{tpu_custom_call.1} parent=1 // pred_check_branch
      %38 = sbr.rel (0) target = $region45
    $region44: #{tpu_custom_call.1} parent=1 // pred_region
      _
    $region45: #{tpu_custom_call.1} parent=1 // pred_fallthru
      _
    %v39 = vld [vmem:[%s0] sm:$0xff]
    %v40 = vld [vmem:[%s1] sm:$0xff]
    %v41 = vld [vmem:[%s1 + $0x8] sm:$0xff]
    %v42 = vld [vmem:[%s1 + $0x10] sm:$0xff]
    %v43 = vld [vmem:[%s1 + $0x18] sm:$0xff]
    %v44 = vld [vmem:[%s1 + $0x20] sm:$0xff]
    %v45 = vld [vmem:[%s1 + $0x28] sm:$0xff]
    %v46 = vld [vmem:[%s1 + $0x30] sm:$0xff]
    %v47 = vld [vmem:[%s1 + $0x38] sm:$0xff]
    %v48 = vld [vmem:[%s1 + $0x40] sm:$0xff]
    %v49 = vld [vmem:[%s1 + $0x48] sm:$0xff]
    %v50 = vld [vmem:[%s1 + $0x50] sm:$0x3]
    %v51 = vld [vmem:[%s1 + $0x58] sm:$0x3]
    %v52 = vld [vmem:[%s2] sm:$0x3]
    %v54 = vlaneseq
    %v55 = vshrl.u32 %v54, 7
    %v56 = vsub.s32 0, %v55
    %v57 = vrot.slane %v52, %v56
    %v58 = vlaneseq
    %v59 = vshrl.u32 %v58, 7
    %v60 = vsub.s32 1, %v59
    %v61 = vrot.slane %v52, %v60
    %vm64 = vcmask 343040
    %v66 = vsel %vm64, %v39, 0
    %vm68 = vcmask 1041408
    %v70 = vsel %vm68, %v50, 0
    %v73 = vsel %vm68, %v51, 0
    %75 = vmatprep.subr.mxu0 0.0
    %76 = vmatpush1.msra.mxu0 0.0
    %77 = vmatprep.subr.mxu0 0.0
    %78 = vmatpush1.msra.mxu0 0.0
    %79 = vmatprep.subr.mxu0 0.0
    %80 = vmatpush1.msra.mxu0 0.0
    %81 = vmatprep.subr.mxu0 0.0
    %82 = vmatpush1.msra.mxu0 0.0
    %83 = vmatprep.subr.mxu0 0.0
    %84 = vmatpush1.msra.mxu0 0.0
    %85 = vmatprep.subr.mxu0 0.0
    %86 = vmatpush1.msra.mxu0 0.0
    %87 = vmatprep.subr.mxu0 0.0
    %88 = vmatpush1.msra.mxu0 0.0
    %89 = vmatprep.subr.mxu0 0.0
    %90 = vmatpush1.msra.mxu0 0.0
    %91 = vmatprep.subr.mxu0 0.0
    %92 = vmatpush1.msra.mxu0 0.0
    %93 = vmatprep.subr.mxu0 0.0
    %94 = vmatpush1.msra.mxu0 0.0
    %95 = vmatprep.subr.mxu0 %v73
    %96 = vmatpush1.msra.mxu0 %v70
    %97 = vmatprep.subr.mxu0 %v49
    %98 = vmatpush1.msra.mxu0 %v48
    %99 = vmatprep.subr.mxu0 %v47
    %100 = vmatpush1.msra.mxu0 %v46
    %101 = vmatprep.subr.mxu0 %v45
    %102 = vmatpush1.msra.mxu0 %v44
    %103 = vmatprep.subr.mxu0 %v43
    %104 = vmatpush1.msra.mxu0 %v42
    %105 = vmatprep.subr.mxu0 %v41
    %106 = vmatpush1.msra.mxu0 %v40
    %107 = vmatprep.subr.mxu0 0.0
    %108 = vmatpush2.msra.mxu0 0.0
    %109 = vmatprep.subr.mxu0 0.0
    %110 = vmatpush2.msra.mxu0 0.0
    %111 = vmatprep.subr.mxu0 0.0
    %112 = vmatpush2.msra.mxu0 0.0
    %113 = vmatprep.subr.mxu0 0.0
    %114 = vmatpush2.msra.mxu0 0.0
    %115 = vmatprep.subr.mxu0 0.0
    %116 = vmatpush2.msra.mxu0 0.0
    %117 = vmatprep.subr.mxu0 0.0
    %118 = vmatpush2.msra.mxu0 0.0
    %119 = vmatprep.subr.mxu0 0.0
    %120 = vmatpush2.msra.mxu0 0.0
    %121 = vmatprep.subr.mxu0 0.0
    %122 = vmatpush2.msra.mxu0 0.0
    %123 = vmatprep.subr.mxu0 0.0
    %124 = vmatpush2.msra.mxu0 0.0
    %125 = vmatprep.subr.mxu0 0.0
    %126 = vmatpush2.msra.mxu0 0.0
    %127 = vmatprep.subr.mxu0 0.0
    %128 = vmatpush2.msra.mxu0 0.0
    %129 = vmatprep.subr.mxu0 0.0
    %130 = vmatpush2.msra.mxu0 0.0
    %131 = vmatprep.subr.mxu0 0.0
    %132 = vmatpush2.msra.mxu0 0.0
    %133 = vmatprep.subr.mxu0 0.0
    %134 = vmatpush2.msra.mxu0 0.0
    %135 = vmatprep.subr.mxu0 0.0
    %136 = vmatpush2.msra.mxu0 0.0
    %137 = vmatprep.subr.mxu0 0.0
    %138 = vmatpush2.msra.mxu0 0.0
    %139 = vmatprep.mubr.f32.mxu0 0.0
    %140 = vmatmul.mubr.f32.gmra.mxu0 %v66
    %v141 = vpop.f32.mrf.mxu0
    %v142 = vadd.f32 %v57, %v141
    %v143 = vpop.f32.mrf.mxu0
    %v144 = vadd.f32 %v61, %v143
    %145 = vdwg.mxu0
    %v146 = vmax.f32 %v142, 0.0
    %v147 = vmax.f32 %v144, 0.0
    %v148 = vld [vmem:[%s3] sm:$0xff]
    %v149 = vld [vmem:[%s3 + $0x8] sm:$0xff]
    %v150 = vld [vmem:[%s3 + $0x10] sm:$0xff]
    %v151 = vld [vmem:[%s3 + $0x18] sm:$0xff]
    %v152 = vld [vmem:[%s3 + $0x20] sm:$0xff]
    %v153 = vld [vmem:[%s3 + $0x28] sm:$0xff]
    %v154 = vld [vmem:[%s3 + $0x30] sm:$0xff]
    %v155 = vld [vmem:[%s3 + $0x38] sm:$0xff]
    %v156 = vld [vmem:[%s3 + $0x40] sm:$0xff]
    %v157 = vld [vmem:[%s3 + $0x48] sm:$0xff]
    %v158 = vld [vmem:[%s3 + $0x50] sm:$0xff]
    %v159 = vld [vmem:[%s3 + $0x58] sm:$0xff]
    %v160 = vld [vmem:[%s3 + $0x60] sm:$0xff]
    %v161 = vld [vmem:[%s3 + $0x68] sm:$0xff]
    %v162 = vld [vmem:[%s3 + $0x70] sm:$0xff]
    %v163 = vld [vmem:[%s3 + $0x78] sm:$0xff]
    %v164 = vld [vmem:[%s3 + $0x80] sm:$0xff]
    %v165 = vld [vmem:[%s3 + $0x88] sm:$0xff]
    %v166 = vld [vmem:[%s3 + $0x90] sm:$0xff]
    %v167 = vld [vmem:[%s3 + $0x98] sm:$0xff]
    %v168 = vld [vmem:[%s3 + $0xa0] sm:$0xff]
    %v169 = vld [vmem:[%s3 + $0xa8] sm:$0xff]
    %v170 = vld [vmem:[%s3 + $0xb0] sm:$0xff]
    %v171 = vld [vmem:[%s3 + $0xb8] sm:$0xff]
    %v172 = vld [vmem:[%s4] sm:$0x1]
    %v174 = vlaneseq
    %v175 = vshrl.u32 %v174, 7
    %v176 = vsub.s32 0, %v175
    %v177 = vrot.slane %v172, %v176
    %vm179 = vcmask 523264
    %v181 = vsel %vm179, %v147, 0
    %183 = vmatprep.subr.mxu0 0.0
    %184 = vmatpush1.msra.mxu0 %v163
    %185 = vmatprep.subr.mxu0 0.0
    %186 = vmatpush1.msra.mxu0 %v162
    %187 = vmatprep.subr.mxu0 0.0
    %188 = vmatpush1.msra.mxu0 %v161
    %189 = vmatprep.subr.mxu0 0.0
    %190 = vmatpush1.msra.mxu0 %v160
    %191 = vmatprep.subr.mxu0 0.0
    %192 = vmatpush1.msra.mxu0 %v159
    %193 = vmatprep.subr.mxu0 0.0
    %194 = vmatpush1.msra.mxu0 %v158
    %195 = vmatprep.subr.mxu0 0.0
    %196 = vmatpush1.msra.mxu0 %v157
    %197 = vmatprep.subr.mxu0 0.0
    %198 = vmatpush1.msra.mxu0 %v156
    %199 = vmatprep.subr.mxu0 0.0
    %200 = vmatpush1.msra.mxu0 %v155
    %201 = vmatprep.subr.mxu0 0.0
    %202 = vmatpush1.msra.mxu0 %v154
    %203 = vmatprep.subr.mxu0 0.0
    %204 = vmatpush1.msra.mxu0 %v153
    %205 = vmatprep.subr.mxu0 0.0
    %206 = vmatpush1.msra.mxu0 %v152
    %207 = vmatprep.subr.mxu0 0.0
    %208 = vmatpush1.msra.mxu0 %v151
    %209 = vmatprep.subr.mxu0 0.0
    %210 = vmatpush1.msra.mxu0 %v150
    %211 = vmatprep.subr.mxu0 0.0
    %212 = vmatpush1.msra.mxu0 %v149
    %213 = vmatprep.subr.mxu0 0.0
    %214 = vmatpush1.msra.mxu0 %v148
    %215 = vmatprep.subr.mxu0 0.0
    %216 = vmatpush2.msra.mxu0 0.0
    %217 = vmatprep.subr.mxu0 0.0
    %218 = vmatpush2.msra.mxu0 0.0
    %219 = vmatprep.subr.mxu0 0.0
    %220 = vmatpush2.msra.mxu0 0.0
    %221 = vmatprep.subr.mxu0 0.0
    %222 = vmatpush2.msra.mxu0 0.0
    %223 = vmatprep.subr.mxu0 0.0
    %224 = vmatpush2.msra.mxu0 0.0
    %225 = vmatprep.subr.mxu0 0.0
    %226 = vmatpush2.msra.mxu0 0.0
    %227 = vmatprep.subr.mxu0 0.0
    %228 = vmatpush2.msra.mxu0 0.0
    %229 = vmatprep.subr.mxu0 0.0
    %230 = vmatpush2.msra.mxu0 0.0
    %231 = vmatprep.subr.mxu0 0.0
    %232 = vmatpush2.msra.mxu0 %v171
    %233 = vmatprep.subr.mxu0 0.0
    %234 = vmatpush2.msra.mxu0 %v170
    %235 = vmatprep.subr.mxu0 0.0
    %236 = vmatpush2.msra.mxu0 %v169
    %237 = vmatprep.subr.mxu0 0.0
    %238 = vmatpush2.msra.mxu0 %v168
    %239 = vmatprep.subr.mxu0 0.0
    %240 = vmatpush2.msra.mxu0 %v167
    %241 = vmatprep.subr.mxu0 0.0
    %242 = vmatpush2.msra.mxu0 %v166
    %243 = vmatprep.subr.mxu0 0.0
    %244 = vmatpush2.msra.mxu0 %v165
    %245 = vmatprep.subr.mxu0 0.0
    %246 = vmatpush2.msra.mxu0 %v164
    %247 = vmatprep.mubr.f32.mxu0 %v181
    %248 = vmatmul.mubr.f32.gmra.mxu0 %v146
    %v249 = vpop.f32.mrf.mxu0
    %v250 = vadd.f32 %v177, %v249
    %v251 = vpop.f32.mrf.mxu0
    %252 = vdwg.mxu0
    %v253 = vxor.u32 %v250, 2147483648
    %v254 = vmul.f32 %v253, 1.442695
    %v255 = vpow.pop %v254
    %v256 = vadd.f32 %v255, 1.0
    %v257 = vrcp.pop %v256
    %v258 = vmul.f32 1.0, %v257
    %v259 = vmul.f32 %v39, %v258
    %v260 = vld [vmem:[%s5] sm:$0xff]
    %v261 = vld [vmem:[%s5 + $0x8] sm:$0xff]
    %v262 = vld [vmem:[%s5 + $0x10] sm:$0xff]
    %v263 = vld [vmem:[%s5 + $0x18] sm:$0xff]
    %v264 = vld [vmem:[%s5 + $0x20] sm:$0xff]
    %v265 = vld [vmem:[%s5 + $0x28] sm:$0x3]
    %v266 = vld [vmem:[%s6] sm:$0x1]
    %v268 = vlaneseq
    %v269 = vshrl.u32 %v268, 7
    %v270 = vsub.s32 0, %v269
    %v271 = vrot.slane %v266, %v270
    %v274 = vsel %vm64, %v259, 0
    %v277 = vsel %vm68, %v265, 0
    %279 = vmatprep.subr.mxu0 0.0
    %280 = vmatpush1.msra.mxu0 0.0
    %281 = vmatprep.subr.mxu0 0.0
    %282 = vmatpush1.msra.mxu0 0.0
    %283 = vmatprep.subr.mxu0 0.0
    %284 = vmatpush1.msra.mxu0 0.0
    %285 = vmatprep.subr.mxu0 0.0
    %286 = vmatpush1.msra.mxu0 0.0
    %287 = vmatprep.subr.mxu0 0.0
    %288 = vmatpush1.msra.mxu0 0.0
    %289 = vmatprep.subr.mxu0 0.0
    %290 = vmatpush1.msra.mxu0 0.0
    %291 = vmatprep.subr.mxu0 0.0
    %292 = vmatpush1.msra.mxu0 0.0
    %293 = vmatprep.subr.mxu0 0.0
    %294 = vmatpush1.msra.mxu0 0.0
    %295 = vmatprep.subr.mxu0 0.0
    %296 = vmatpush1.msra.mxu0 0.0
    %297 = vmatprep.subr.mxu0 0.0
    %298 = vmatpush1.msra.mxu0 0.0
    %299 = vmatprep.subr.mxu0 0.0
    %300 = vmatpush1.msra.mxu0 %v277
    %301 = vmatprep.subr.mxu0 0.0
    %302 = vmatpush1.msra.mxu0 %v264
    %303 = vmatprep.subr.mxu0 0.0
    %304 = vmatpush1.msra.mxu0 %v263
    %305 = vmatprep.subr.mxu0 0.0
    %306 = vmatpush1.msra.mxu0 %v262
    %307 = vmatprep.subr.mxu0 0.0
    %308 = vmatpush1.msra.mxu0 %v261
    %309 = vmatprep.subr.mxu0 0.0
    %310 = vmatpush1.msra.mxu0 %v260
    %311 = vmatprep.subr.mxu0 0.0
    %312 = vmatpush2.msra.mxu0 0.0
    %313 = vmatprep.subr.mxu0 0.0
    %314 = vmatpush2.msra.mxu0 0.0
    %315 = vmatprep.subr.mxu0 0.0
    %316 = vmatpush2.msra.mxu0 0.0
    %317 = vmatprep.subr.mxu0 0.0
    %318 = vmatpush2.msra.mxu0 0.0
    %319 = vmatprep.subr.mxu0 0.0
    %320 = vmatpush2.msra.mxu0 0.0
    %321 = vmatprep.subr.mxu0 0.0
    %322 = vmatpush2.msra.mxu0 0.0
    %323 = vmatprep.subr.mxu0 0.0
    %324 = vmatpush2.msra.mxu0 0.0
    %325 = vmatprep.subr.mxu0 0.0
    %326 = vmatpush2.msra.mxu0 0.0
    %327 = vmatprep.subr.mxu0 0.0
    %328 = vmatpush2.msra.mxu0 0.0
    %329 = vmatprep.subr.mxu0 0.0
    %330 = vmatpush2.msra.mxu0 0.0
    %331 = vmatprep.subr.mxu0 0.0
    %332 = vmatpush2.msra.mxu0 0.0
    %333 = vmatprep.subr.mxu0 0.0
    %334 = vmatpush2.msra.mxu0 0.0
    %335 = vmatprep.subr.mxu0 0.0
    %336 = vmatpush2.msra.mxu0 0.0
    %337 = vmatprep.subr.mxu0 0.0
    %338 = vmatpush2.msra.mxu0 0.0
    %339 = vmatprep.subr.mxu0 0.0
    %340 = vmatpush2.msra.mxu0 0.0
    %341 = vmatprep.subr.mxu0 0.0
    %342 = vmatpush2.msra.mxu0 0.0
    %343 = vmatprep.mubr.f32.mxu0 0.0
    %344 = vmatmul.mubr.f32.gmra.mxu0 %v274
    %v345 = vpop.f32.mrf.mxu0
    %v346 = vadd.f32 %v271, %v345
    %v347 = vpop.f32.mrf.mxu0
    %348 = vdwg.mxu0
    %v349 = vmax.f32 %v346, 0.0
    %v350 = vld [vmem:[%s7] sm:$0xff]
    %v351 = vld [vmem:[%s7 + $0x8] sm:$0xff]
    %v352 = vld [vmem:[%s7 + $0x10] sm:$0xff]
    %v353 = vld [vmem:[%s7 + $0x18] sm:$0xff]
    %v354 = vld [vmem:[%s7 + $0x20] sm:$0xff]
    %v355 = vld [vmem:[%s7 + $0x28] sm:$0xff]
    %v356 = vld [vmem:[%s7 + $0x30] sm:$0xff]
    %v357 = vld [vmem:[%s7 + $0x38] sm:$0xff]
    %v358 = vld [vmem:[%s8] sm:$0x1]
    %v360 = vlaneseq
    %v361 = vshrl.u32 %v360, 7
    %v362 = vsub.s32 0, %v361
    %v363 = vrot.slane %v358, %v362
    %v366 = vsel %vm179, %v349, 0
    %368 = vmatprep.subr.mxu0 0.0
    %369 = vmatpush1.msra.mxu0 0.0
    %370 = vmatprep.subr.mxu0 0.0
    %371 = vmatpush1.msra.mxu0 0.0
    %372 = vmatprep.subr.mxu0 0.0
    %373 = vmatpush1.msra.mxu0 0.0
    %374 = vmatprep.subr.mxu0 0.0
    %375 = vmatpush1.msra.mxu0 0.0
    %376 = vmatprep.subr.mxu0 0.0
    %377 = vmatpush1.msra.mxu0 0.0
    %378 = vmatprep.subr.mxu0 0.0
    %379 = vmatpush1.msra.mxu0 0.0
    %380 = vmatprep.subr.mxu0 0.0
    %381 = vmatpush1.msra.mxu0 0.0
    %382 = vmatprep.subr.mxu0 0.0
    %383 = vmatpush1.msra.mxu0 0.0
    %384 = vmatprep.subr.mxu0 0.0
    %385 = vmatpush1.msra.mxu0 %v357
    %386 = vmatprep.subr.mxu0 0.0
    %387 = vmatpush1.msra.mxu0 %v356
    %388 = vmatprep.subr.mxu0 0.0
    %389 = vmatpush1.msra.mxu0 %v355
    %390 = vmatprep.subr.mxu0 0.0
    %391 = vmatpush1.msra.mxu0 %v354
    %392 = vmatprep.subr.mxu0 0.0
    %393 = vmatpush1.msra.mxu0 %v353
    %394 = vmatprep.subr.mxu0 0.0
    %395 = vmatpush1.msra.mxu0 %v352
    %396 = vmatprep.subr.mxu0 0.0
    %397 = vmatpush1.msra.mxu0 %v351
    %398 = vmatprep.subr.mxu0 0.0
    %399 = vmatpush1.msra.mxu0 %v350
    %400 = vmatprep.subr.mxu0 0.0
    %401 = vmatpush2.msra.mxu0 0.0
    %402 = vmatprep.subr.mxu0 0.0
    %403 = vmatpush2.msra.mxu0 0.0
    %404 = vmatprep.subr.mxu0 0.0
    %405 = vmatpush2.msra.mxu0 0.0
    %406 = vmatprep.subr.mxu0 0.0
    %407 = vmatpush2.msra.mxu0 0.0
    %408 = vmatprep.subr.mxu0 0.0
    %409 = vmatpush2.msra.mxu0 0.0
    %410 = vmatprep.subr.mxu0 0.0
    %411 = vmatpush2.msra.mxu0 0.0
    %412 = vmatprep.subr.mxu0 0.0
    %413 = vmatpush2.msra.mxu0 0.0
    %414 = vmatprep.subr.mxu0 0.0
    %415 = vmatpush2.msra.mxu0 0.0
    %416 = vmatprep.subr.mxu0 0.0
    %417 = vmatpush2.msra.mxu0 0.0
    %418 = vmatprep.subr.mxu0 0.0
    %419 = vmatpush2.msra.mxu0 0.0
    %420 = vmatprep.subr.mxu0 0.0
    %421 = vmatpush2.msra.mxu0 0.0
    %422 = vmatprep.subr.mxu0 0.0
    %423 = vmatpush2.msra.mxu0 0.0
    %424 = vmatprep.subr.mxu0 0.0
    %425 = vmatpush2.msra.mxu0 0.0
    %426 = vmatprep.subr.mxu0 0.0
    %427 = vmatpush2.msra.mxu0 0.0
    %428 = vmatprep.subr.mxu0 0.0
    %429 = vmatpush2.msra.mxu0 0.0
    %430 = vmatprep.subr.mxu0 0.0
    %431 = vmatpush2.msra.mxu0 0.0
    %432 = vmatprep.mubr.f32.mxu0 0.0
    %433 = vmatmul.mubr.f32.gmra.mxu0 %v366
    %v434 = vpop.f32.mrf.mxu0
    %v435 = vadd.f32 %v363, %v434
    %v436 = vpop.f32.mrf.mxu0
    %437 = vdwg.mxu0
    %v438 = vmax.f32 %v435, 0.0
    %v439 = vld [vmem:[%s9] sm:$0xff]
    %v440 = vld [vmem:[%s9 + $0x8] sm:$0xff]
    %v441 = vld [vmem:[%s9 + $0x10] sm:$0xff]
    %v442 = vld [vmem:[%s9 + $0x18] sm:$0xff]
    %v443 = vld [vmem:[%s10] sm:$0x1]
    %v445 = vlaneseq
    %v446 = vshrl.u32 %v445, 7
    %v447 = vsub.s32 0, %v446
    %v448 = vrot.slane %v443, %v447
    %vm450 = vcmask 261120
    %v452 = vsel %vm450, %v438, 0
    %454 = vmatprep.subr.mxu0 0.0
    %455 = vmatpush1.msra.mxu0 0.0
    %456 = vmatprep.subr.mxu0 0.0
    %457 = vmatpush1.msra.mxu0 0.0
    %458 = vmatprep.subr.mxu0 0.0
    %459 = vmatpush1.msra.mxu0 0.0
    %460 = vmatprep.subr.mxu0 0.0
    %461 = vmatpush1.msra.mxu0 0.0
    %462 = vmatprep.subr.mxu0 0.0
    %463 = vmatpush1.msra.mxu0 0.0
    %464 = vmatprep.subr.mxu0 0.0
    %465 = vmatpush1.msra.mxu0 0.0
    %466 = vmatprep.subr.mxu0 0.0
    %467 = vmatpush1.msra.mxu0 0.0
    %468 = vmatprep.subr.mxu0 0.0
    %469 = vmatpush1.msra.mxu0 0.0
    %470 = vmatprep.subr.mxu0 0.0
    %471 = vmatpush1.msra.mxu0 0.0
    %472 = vmatprep.subr.mxu0 0.0
    %473 = vmatpush1.msra.mxu0 0.0
    %474 = vmatprep.subr.mxu0 0.0
    %475 = vmatpush1.msra.mxu0 0.0
    %476 = vmatprep.subr.mxu0 0.0
    %477 = vmatpush1.msra.mxu0 0.0
    %478 = vmatprep.subr.mxu0 0.0
    %479 = vmatpush1.msra.mxu0 %v442
    %480 = vmatprep.subr.mxu0 0.0
    %481 = vmatpush1.msra.mxu0 %v441
    %482 = vmatprep.subr.mxu0 0.0
    %483 = vmatpush1.msra.mxu0 %v440
    %484 = vmatprep.subr.mxu0 0.0
    %485 = vmatpush1.msra.mxu0 %v439
    %486 = vmatprep.subr.mxu0 0.0
    %487 = vmatpush2.msra.mxu0 0.0
    %488 = vmatprep.subr.mxu0 0.0
    %489 = vmatpush2.msra.mxu0 0.0
    %490 = vmatprep.subr.mxu0 0.0
    %491 = vmatpush2.msra.mxu0 0.0
    %492 = vmatprep.subr.mxu0 0.0
    %493 = vmatpush2.msra.mxu0 0.0
    %494 = vmatprep.subr.mxu0 0.0
    %495 = vmatpush2.msra.mxu0 0.0
    %496 = vmatprep.subr.mxu0 0.0
    %497 = vmatpush2.msra.mxu0 0.0
    %498 = vmatprep.subr.mxu0 0.0
    %499 = vmatpush2.msra.mxu0 0.0
    %500 = vmatprep.subr.mxu0 0.0
    %501 = vmatpush2.msra.mxu0 0.0
    %502 = vmatprep.subr.mxu0 0.0
    %503 = vmatpush2.msra.mxu0 0.0
    %504 = vmatprep.subr.mxu0 0.0
    %505 = vmatpush2.msra.mxu0 0.0
    %506 = vmatprep.subr.mxu0 0.0
    %507 = vmatpush2.msra.mxu0 0.0
    %508 = vmatprep.subr.mxu0 0.0
    %509 = vmatpush2.msra.mxu0 0.0
    %510 = vmatprep.subr.mxu0 0.0
    %511 = vmatpush2.msra.mxu0 0.0
    %512 = vmatprep.subr.mxu0 0.0
    %513 = vmatpush2.msra.mxu0 0.0
    %514 = vmatprep.subr.mxu0 0.0
    %515 = vmatpush2.msra.mxu0 0.0
    %516 = vmatprep.subr.mxu0 0.0
    %517 = vmatpush2.msra.mxu0 0.0
    %518 = vmatprep.mubr.f32.mxu0 0.0
    %519 = vmatmul.mubr.f32.gmra.mxu0 %v452
    %v520 = vpop.f32.mrf.mxu0
    %v521 = vadd.f32 %v448, %v520
    %v522 = vpop.f32.mrf.mxu0
    %523 = vdwg.mxu0
    %524 = vst [vmem:[#allocation2] sm:$0xff] %v521
    // Predicated region
    $region46: #{tpu_custom_call.1} parent=1 // pred_check
      _
    $region47: #{tpu_custom_call.1} parent=1 // pred_check_branch
      %526 = sbr.rel (0) target = $region49
    $region48: #{tpu_custom_call.1} parent=1 // pred_region
      %s528 = ssub.s32 128, 128
      %529 = vsyncadd [#allocation3], %s528
      %s531 = sshll.u32 [#allocation2], 4
      %s532 = int_to_ptr.vmem [resolvable:$true] %s531
      %534 = dma.vmem_to_hbm [thread:$0]  %s532, 128, %s11, [#allocation3]
    $region49: #{tpu_custom_call.1} parent=1 // pred_fallthru
      _
    // Predicated region
    $region50: #{tpu_custom_call.1} parent=1 // pred_check
      _
    $region51: #{tpu_custom_call.1} parent=1 // pred_check_branch
      %536 = sbr.rel (0) target = $region53
    $region52: #{tpu_custom_call.1} parent=1 // pred_region
      %537 = dma.done [#allocation3], 128
    $region53: #{tpu_custom_call.1} parent=1 // pred_fallthru
      _
    %538 = vsyncpa [#allocation3], 1

</llo_original>
